<compile_context>
chip_gen: v6e
topology: v6e:2x2x1
jax: 0.10.0
libtpu: 0.0.40
codegen_flags: <defaults>
</compile_context>

<pallas_src>
import functools
import math

import jax
import jax.numpy as jnp
from jax import lax
from jax.experimental import pallas as pl
from jax.experimental.pallas import tpu as pltpu


def make_sinusoidal_pe(max_len: int, d_model: int, dtype=jnp.float32):
    """Reference buffer, identical to the PyTorch __init__ construction."""
    position = jnp.arange(max_len, dtype=jnp.float32)[:, None]                 # (L, 1)
    div_term = jnp.exp(
        jnp.arange(0, d_model, 2, dtype=jnp.float32) * (-math.log(10000.0) / d_model)
    )                                                                          # (D/2,)
    pe = jnp.zeros((max_len, 1, d_model), dtype=jnp.float32)
    pe = pe.at[:, 0, 0::2].set(jnp.sin(position * div_term))
    pe = pe.at[:, 0, 1::2].set(jnp.cos(position * div_term))
    return pe.astype(dtype)


def _round_up(x: int, m: int) -> int:
    return ((x + m - 1) // m) * m


def _choose_tile_s(S: int, row_bytes: int, align: int,
                   budget_bytes: int, target_steps: int = 8) -> int:
    """Tile rows: align-multiple, block <= budget, and >= target_steps grid steps
    when S is large enough (keeps both v7x TensorCores busy)."""
    max_rows = max(align, (budget_bytes // max(1, row_bytes)) // align * align)
    want = _round_up(pl.cdiv(S, target_steps), align)
    return int(max(align, min(max_rows, want)))


def _pe_dropout_kernel(seed_ref, x_ref, freq_ref, phase_ref, o_ref, *,
                       p: float, train: bool):
    i = pl.program_id(0)
    tile_s, bd = x_ref.shape

    # Absolute sequence position as a (tile_s, 1) column; broadcast against the
    # (1, bd) per-lane constants inside the multiply (no full-tile iota).
    pos = (i * tile_s
           + lax.broadcasted_iota(jnp.int32, (tile_s, 1), 0)).astype(jnp.float32)
    # Positional encoding on the EUP: one sin per element.
    pe = jnp.sin(pos * freq_ref[...] + phase_ref[...])                 # (tile_s, bd)

    y = x_ref[...].astype(jnp.float32) + pe

    if train and p > 0.0:
        # Inverted dropout via a stateless counter-based hash (splitmix32 fmix)
        # on the global element index — portable (Mosaic + interpret), and the
        # mask is independent of tile size / which TensorCore runs the tile.
        rows = i * tile_s + lax.broadcasted_iota(jnp.int32, (tile_s, 1), 0)
        cols = lax.broadcasted_iota(jnp.int32, (1, bd), 1)
        idx = (rows * bd + cols).astype(jnp.uint32)                    # (tile_s, bd)
        seed_u = seed_ref[0].astype(jnp.uint32)
        h = idx ^ (seed_u * jnp.uint32(0x9E3779B9))
        h = (h ^ (h >> jnp.uint32(16))) * jnp.uint32(0x7FEB352D)
        h = (h ^ (h >> jnp.uint32(15))) * jnp.uint32(0x846CA68B)
        h = h ^ (h >> jnp.uint32(16))
        threshold = jnp.uint32(min(int(round(p * 4294967296.0)), 4294967295))
        keep = h >= threshold                                          # P(keep)=1-p
        y = jnp.where(keep, y * (1.0 / (1.0 - p)), 0.0)

    o_ref[...] = y.astype(o_ref.dtype)


def sinusoidal_positional_encoding(x, *, p: float = 0.1, train: bool = False,
                                   seed: int = 0, tile_s: int | None = None,
                                   max_len: int = 5000,
                                   block_budget_bytes: int = 4 * 1024 * 1024,
                                   vmem_limit_bytes: int = 32 * 1024 * 1024):
    """x: (S, B, D) float array. Returns dropout(x + pe[:S]) with the same dtype."""
    S, B, D = x.shape
    assert S <= max_len, "sequence longer than max_len"
    BD = B * D

    LANE = 128
    BD_pad = _round_up(BD, LANE)                      # lane-dense, unmasked stores
    align = 16 if x.dtype.itemsize == 2 else 8        # bf16 packs 2 rows / sublane

    # Per-lane constants (repeated over batch in the lane axis, b-major d-minor
    # to match the reshape): inv-frequency and sin/cos phase (padded lanes -> 0).
    d_idx = jnp.arange(D)
    inv_freq_d = jnp.exp(((d_idx // 2) * 2).astype(jnp.float32)
                         * (-math.log(10000.0) / D))
    phase_d = jnp.where(d_idx % 2 == 0, 0.0, math.pi / 2.0).astype(jnp.float32)
    inv_freq = jnp.tile(inv_freq_d, (B,))
    phase = jnp.tile(phase_d, (B,))
    if BD_pad != BD:
        inv_freq = jnp.pad(inv_freq, (0, BD_pad - BD))
        phase = jnp.pad(phase, (0, BD_pad - BD))
    inv_freq = inv_freq.reshape(1, BD_pad)
    phase = phase.reshape(1, BD_pad)

    # Tile choice + padding of S so arbitrary lengths (primes, 5000, ...) work.
    row_bytes = BD_pad * x.dtype.itemsize
    if tile_s is None:
        tile_s = _choose_tile_s(S, row_bytes, align, block_budget_bytes)
    else:
        tile_s = max(align, _round_up(int(tile_s), align))
    grid_s = pl.cdiv(S, tile_s)
    S_pad = grid_s * tile_s

    x2 = x.reshape(S, BD)
    if S_pad != S or BD_pad != BD:
        x2 = jnp.pad(x2, ((0, S_pad - S), (0, BD_pad - BD)))

    kernel = functools.partial(_pe_dropout_kernel, p=float(p), train=bool(train))
    seed_arr = jnp.array([seed], dtype=jnp.int32)

    out2 = pl.pallas_call(
        kernel,
        out_shape=jax.ShapeDtypeStruct((S_pad, BD_pad), x.dtype),
        grid_spec=pltpu.PrefetchScalarGridSpec(
            num_scalar_prefetch=1,
            grid=(grid_s,),
            in_specs=[
                pl.BlockSpec((tile_s, BD_pad), lambda i, seed: (i, 0)),
                pl.BlockSpec((1, BD_pad), lambda i, seed: (0, 0)),
                pl.BlockSpec((1, BD_pad), lambda i, seed: (0, 0)),
            ],
            out_specs=pl.BlockSpec((tile_s, BD_pad), lambda i, seed: (i, 0)),
        ),
        compiler_params=pltpu.CompilerParams(
            dimension_semantics=("parallel",),       # disjoint tiles: v7x 2-TC shard
            vmem_limit_bytes=vmem_limit_bytes,       # safe on v5e/v6e/v7x
        ),
    )(seed_arr, x2, inv_freq, phase)

    out = out2[:S, :BD].reshape(S, B, D)
    return out


if __name__ == "__main__":
    MAX_LEN = 5000

    # Small shapes implied by the module: seq=8, batch=2, d_model=32.
    S, B, D = 8, 2, 32
    key = jax.random.PRNGKey(0)
    x = jax.random.normal(key, (S, B, D), dtype=jnp.float32)
    pe_tbl = make_sinusoidal_pe(MAX_LEN, D)

    # Eval mode (dropout = identity): exact semantics vs. pure-JAX reference.
    out_eval = jax.block_until_ready(
        sinusoidal_positional_encoding(x, p=0.1, train=False))
    ref = x + pe_tbl[:S]
    assert out_eval.shape == (S, B, D) and out_eval.dtype == x.dtype
    assert jnp.allclose(out_eval, ref, atol=1e-5, rtol=1e-5)

    # Multi-tile grid + non-multiple-of-8 sequence length (exercises S padding)
    # with an already 128-aligned lane dim (B*D = 128).
    S2, B2, D2 = 21, 2, 64
    x2 = jax.random.normal(jax.random.PRNGKey(1), (S2, B2, D2), dtype=jnp.float32)
    pe_tbl2 = make_sinusoidal_pe(MAX_LEN, D2)
    out2 = jax.block_until_ready(
        sinusoidal_positional_encoding(x2, p=0.1, train=False, tile_s=8))
    assert jnp.allclose(out2, x2 + pe_tbl2[:S2], atol=1e-5, rtol=1e-5)

    # bf16 inputs (16-row alignment path); compute stays f32, storage bf16.
    x3 = jax.random.normal(jax.random.PRNGKey(2), (16, 2, 64), dtype=jnp.bfloat16)
    out3 = jax.block_until_ready(
        sinusoidal_positional_encoding(x3, p=0.1, train=False))
    ref3 = x3.astype(jnp.float32) + pe_tbl2[:16]
    assert out3.dtype == jnp.bfloat16
    assert jnp.allclose(out3.astype(jnp.float32), ref3, atol=5e-2, rtol=2e-2)

    # Training mode: inverted dropout via the portable in-kernel hash.
    out_tr = jax.block_until_ready(
        sinusoidal_positional_encoding(x, p=0.1, train=True, seed=123))
    assert out_tr.shape == (S, B, D)
    assert bool(jnp.all(jnp.isfinite(out_tr)))
    zero_frac = float(jnp.mean(out_tr == 0.0))
    assert 0.0 < zero_frac < 0.4, f"unexpected drop fraction {zero_frac}"
    nz = out_tr != 0.0
    assert jnp.allclose(jnp.where(nz, out_tr, 0.0),
                        jnp.where(nz, ref / 0.9, 0.0), atol=1e-4, rtol=1e-4)

    print("KERNEL_OK")
</pallas_src>

<mosaic_0001>
module attributes {stable_mosaic.version = 11 : i64} {
  func.func @_pe_dropout_kernel(%arg0: i32, %arg1: memref<1xi32, #tpu.memory_space<smem>>, %arg2: memref<8x128xf32, #tpu.memory_space<vmem>>, %arg3: memref<1x128xf32, #tpu.memory_space<vmem>>, %arg4: memref<1x128xf32, #tpu.memory_space<vmem>>, %arg5: memref<8x128xf32, #tpu.memory_space<vmem>>) attributes {dimension_semantics = [#tpu.dimension_semantics<parallel>], iteration_bounds = array<i64: 1>, scalar_prefetch = 1 : i64, scratch_operands = 0 : i64, tpu.core_type = #tpu.core_type<tc>, window_params = [{transform_indices = @transform_0, window_bounds = array<i64: 8, 128>}, {pipeline_mode = #tpu.pipeline_mode<synchronous>, transform_indices = @transform_1, window_bounds = array<i64: 1, 128>}, {pipeline_mode = #tpu.pipeline_mode<synchronous>, transform_indices = @transform_2, window_bounds = array<i64: 1, 128>}, {transform_indices = @transform_3, window_bounds = array<i64: 8, 128>}]} {
    %c8_i32 = arith.constant 8 : i32
    %0 = arith.muli %arg0, %c8_i32 : i32
    %1 = tpu.iota {dimensions = array<i32: 0>} : vector<8x1xi32>
    %2 = vector.broadcast %0 : i32 to vector<8x1xi32>
    %3 = arith.addi %2, %1 : vector<8x1xi32>
    %4 = arith.sitofp %3 : vector<8x1xi32> to vector<8x1xf32>
    %c0 = arith.constant 0 : index
    %c0_0 = arith.constant 0 : index
    %5 = vector.load %arg3[%c0, %c0_0] : memref<1x128xf32, #tpu.memory_space<vmem>>, vector<1x128xf32>
    %6 = vector.broadcast %4 : vector<8x1xf32> to vector<8x128xf32>
    %7 = vector.broadcast %5 : vector<1x128xf32> to vector<8x128xf32>
    %8 = arith.mulf %6, %7 : vector<8x128xf32>
    %c0_1 = arith.constant 0 : index
    %c0_2 = arith.constant 0 : index
    %9 = vector.load %arg4[%c0_1, %c0_2] : memref<1x128xf32, #tpu.memory_space<vmem>>, vector<1x128xf32>
    %10 = vector.broadcast %9 : vector<1x128xf32> to vector<8x128xf32>
    %11 = arith.addf %8, %10 : vector<8x128xf32>
    %12 = math.sin %11 : vector<8x128xf32>
    %c0_3 = arith.constant 0 : index
    %c0_4 = arith.constant 0 : index
    %13 = vector.load %arg2[%c0_3, %c0_4] : memref<8x128xf32, #tpu.memory_space<vmem>>, vector<8x128xf32>
    %14 = arith.addf %13, %12 : vector<8x128xf32>
    %c0_5 = arith.constant 0 : index
    %c0_6 = arith.constant 0 : index
    %15 = vector.load %arg5[%c0_5, %c0_6] : memref<8x128xf32, #tpu.memory_space<vmem>>, vector<8x128xf32>
    tpu.vector_store %arg5[%c0_5, %c0_6], %14 {strides = array<i32>} : memref<8x128xf32, #tpu.memory_space<vmem>>, vector<8x128xf32>,
    return
  }
  func.func @transform_0(%arg0: i32, %arg1: memref<1xi32, #tpu.memory_space<smem>>) -> (i32, i32) {
    %c0_i32 = arith.constant 0 : i32
    %c0_i32_0 = arith.constant 0 : i32
    return %arg0, %c0_i32 : i32, i32
  }
  func.func @transform_1(%arg0: i32, %arg1: memref<1xi32, #tpu.memory_space<smem>>) -> (i32, i32) {
    %c0_i32 = arith.constant 0 : i32
    %c0_i32_0 = arith.constant 0 : i32
    %c0_i32_1 = arith.constant 0 : i32
    return %c0_i32, %c0_i32_0 : i32, i32
  }
  func.func @transform_2(%arg0: i32, %arg1: memref<1xi32, #tpu.memory_space<smem>>) -> (i32, i32) {
    %c0_i32 = arith.constant 0 : i32
    %c0_i32_0 = arith.constant 0 : i32
    %c0_i32_1 = arith.constant 0 : i32
    return %c0_i32, %c0_i32_0 : i32, i32
  }
  func.func @transform_3(%arg0: i32, %arg1: memref<1xi32, #tpu.memory_space<smem>>) -> (i32, i32) {
    %c0_i32 = arith.constant 0 : i32
    %c0_i32_0 = arith.constant 0 : i32
    return %arg0, %c0_i32 : i32, i32
  }
}

</mosaic_0001>

<llo_original>
// kernel: tpu_custom_call.1
$region0: #{tpu_custom_call.1}
  #allocation0 [shape = 'u32[]', space=smem, size = 0x4, offset = 0x4, fixed_abs, tag = 'smem constant byte address 0x4 - core index']
  #allocation1 [shape = 'u32[144,128]{1,0:T(1,128)}', space=vmem, size = 0x12000, scoped, tag = 'internal scratch']
  #allocation2 [shape = 's32[1]{0}', space=sflag, size = 0x4, scoped, tag = 'scoped memory for tpu_custom_call.1']
  #allocation3 [shape = 's32[1]{0:T(128)S(6)}', space=smem, size = 0x200, scoped, tag = 'prefetched SMEM operand 0']
  %s0 = inlined_call_operand.<no memory space> [shape: s32[1], index: 0, kind: input, shape index: {}]
  %s1 = inlined_call_operand.hbm [shape: f32[8,128], index: 1, kind: input, shape index: {}]
  %s2 = inlined_call_operand.vmem [shape: f32[1,128], index: 2, kind: input, shape index: {}]
  %s3 = inlined_call_operand.vmem [shape: f32[1,128], index: 3, kind: input, shape index: {}]
  %s4 = inlined_call_operand.hbm [shape: f32[8,128], index: 4, kind: output, shape index: {}]
  %s5 = sld [smem:[#allocation0]]
  $region26: #{tpu_custom_call.1} parent=0
    _
  %s7 = ssub.s32 1, %s5
  %s8 = scalar_select 0, %s7, %s5
  %9 = sst [smem:[#allocation3]] %s0
  $region1: #{tpu_custom_call.1} parent=0
    #allocation4 [shape = 'u8[4096]{0}', space=vmem, size = 0x1000, scoped, tag = 'input window, operand 1, single buffered']
    #allocation5 [shape = 's32[1]{0}', space=sflag, size = 0x4, scoped, tag = 'scoped memory for tpu_custom_call.1']
    #allocation6 [shape = 's32[1]{0}', space=sflag, size = 0x4, scoped, tag = 'scoped memory for tpu_custom_call.1']
    #allocation7 [shape = 'u8[4096]{0}', space=vmem, size = 0x1000, scoped, tag = 'output window, operand 0, single buffered']
    %10 = vsyncpa [#allocation5], 0
    %11 = vsyncpa [#allocation6], 0
    // Predicated region
    $region2: #{tpu_custom_call.1} parent=1 // pred_check
      _
    $region3: #{tpu_custom_call.1} parent=1 // pred_check_branch
      %13 = sbr.rel (0) target = $region5
    $region4: #{tpu_custom_call.1} parent=1 // pred_region
      %s15 = ssub.s32 128, 128
      %16 = vsyncadd [#allocation5], %s15
      %s18 = sshll.u32 [#allocation4], 4
      %s19 = int_to_ptr.vmem [resolvable:$true] %s18
      %21 = dma.hbm_to_vmem [thread:$0]  %s1, 128, %s19, [#allocation5]
    $region5: #{tpu_custom_call.1} parent=1 // pred_fallthru
      _
    // Predicated region
    $region6: #{tpu_custom_call.1} parent=1 // pred_check
      _
    $region7: #{tpu_custom_call.1} parent=1 // pred_check_branch
      %23 = sbr.rel (0) target = $region9
    $region8: #{tpu_custom_call.1} parent=1 // pred_region
      _
    $region9: #{tpu_custom_call.1} parent=1 // pred_fallthru
      _
    // Predicated region
    $region10: #{tpu_custom_call.1} parent=1 // pred_check
      _
    $region11: #{tpu_custom_call.1} parent=1 // pred_check_branch
      %25 = sbr.rel (0) target = $region13
    $region12: #{tpu_custom_call.1} parent=1 // pred_region
      _
    $region13: #{tpu_custom_call.1} parent=1 // pred_fallthru
      _
    // Predicated region
    $region14: #{tpu_custom_call.1} parent=1 // pred_check
      _
    $region15: #{tpu_custom_call.1} parent=1 // pred_check_branch
      %27 = sbr.rel (0) target = $region17
    $region16: #{tpu_custom_call.1} parent=1 // pred_region
      %28 = dma.done [#allocation5], 128
    $region17: #{tpu_custom_call.1} parent=1 // pred_fallthru
      _
    %s29 = smul.u32 0, 8
    %v30 = vlaneseq
    %v31 = vshrl.u32 %v30, 7
    %v32 = vstv %s29
    %v33 = vadd.s32 %v32, %v31
    %v34 = vcvt.s32.f32 %v33
    %v35 = vld [vmem:[%s2] sm:$0x1]
    %v37 = vlaneseq
    %v38 = vshrl.u32 %v37, 7
    %v39 = vsub.s32 0, %v38
    %v40 = vrot.slane %v35, %v39
    %v42 = vmul.f32 %v34, %v40
    %v43 = vld [vmem:[%s3] sm:$0x1]
    %v45 = vlaneseq
    %v46 = vshrl.u32 %v45, 7
    %v47 = vsub.s32 0, %v46
    %v48 = vrot.slane %v43, %v47
    %v50 = vadd.f32 %v42, %v48
    %v51 = vand.u32 2147483647, %v50
    %vm52 = vcmp.le.f32.partialorder %v51, 0.7853982
    %vm53 = vcmp.lt.s32.totalorder %v50, 0
    %v54 = vand.u32 %v50, 2139095040
    %v55 = vshrl.u32 %v54, 23
    %v56 = vsub.s32 %v55, 127
    %v57 = vand.u32 2147483647, %v50
    %v58 = vand.u32 %v57, 8388607
    %v59 = vor.u32 %v58, 8388608
    %v60 = vsub.s32 0, %v59
    %v61 = vadd.s32 %v56, 1
    %vm62 = vcmp.gt.s32.totalorder %v61, 0
    %v63 = vsel %vm62, %v61, 0
    %v64 = vshrl.u32 %v63, 5
    %v65 = vand.u32 %v63, 31
    %v66 = vsub.s32 32, %v65
    %v67 = vshrl.u32 683565275, %v66
    %v68 = vshll.u32 683565275, %v65
    %v69 = vshrl.u32 2475754826, %v66
    %v70 = vor.u32 %v68, %v69
    %v71 = vshll.u32 2475754826, %v65
    %v72 = vshrl.u32 2131351028, %v66
    %v73 = vor.u32 %v71, %v72
    %v74 = vshll.u32 2131351028, %v65
    %v75 = vshrl.u32 2102212464, %v66
    %v76 = vor.u32 %v74, %v75
    %v77 = vshll.u32 2102212464, %v65
    %v78 = vshrl.u32 920167782, %v66
    %v79 = vor.u32 %v77, %v78
    %v80 = vshll.u32 920167782, %v65
    %v81 = vshrl.u32 1326507024, %v66
    %v82 = vor.u32 %v80, %v81
    %vm83 = vcmp.lt.s32.totalorder %v64, 1
    %vm84 = vcmp.lt.s32.totalorder %v64, 2
    %vm85 = vcmp.lt.s32.totalorder %v64, 3
    %vm86 = vcmp.lt.s32.totalorder %v64, 4
    %v87 = vsel %vm83, %v67, %v70
    %v88 = vsel %vm86, %v76, 2102212464
    %v89 = vsel %vm85, %v73, %v88
    %v90 = vsel %vm84, %v87, %v89
    %v91 = vsel %vm83, %v70, %v73
    %v92 = vsel %vm86, %v79, 920167782
    %v93 = vsel %vm85, %v76, %v92
    %v94 = vsel %vm84, %v91, %v93
    %v95 = vsel %vm83, %v73, %v76
    %v96 = vsel %vm86, %v82, 1326507024
    %v97 = vsel %vm85, %v79, %v96
    %v98 = vsel %vm84, %v95, %v97
    %v99 = vshll.u32 %v59, 8
    %v100 = vmul.u32.u64.compose %v99, %v98
    %v101 = vextract.low.u32 %v100
    %v102 = vextract.high.u32 %v100
    %v103 = vmul.u32.u64.compose %v99, %v94
    %v104 = vextract.low.u32 %v103
    %v105 = vextract.high.u32 %v103
    %v106 = vmul.u32 %v99, %v90
    %v107 = vadd.s32 %v102, %v104
    %vm108 = vc.u32 %v102, %v104
    %v109 = vadd.s32 %v105, 1
    %v110 = vsel %vm108, %v109, %v105
    %v111 = vadd.s32 %v106, %v110
    %v112 = vadd.s32 %v111, 536870912
    %v113 = vshrl.u32 %v112, 30
    %v114 = vshll.u32 %v113, 30
    %v115 = vsub.s32 %v111, %v114
    %vm116 = vcmp.lt.s32.totalorder %v115, 0
    %v117 = vsub.s32 0, %v115
    %v118 = vsel %vm116, %v117, %v115
    %v119 = vclz %v118
    %v120 = vsub.s32 %v119, 2
    %vm121 = vcmp.gt.s32.totalorder 0, %v120
    %v122 = vsel %vm121, 0, %v120
    %v123 = vsub.s32 32, %v122
    %v124 = vshll.u32 %v115, %v122
    %v125 = vshrl.u32 %v107, %v123
    %v126 = vor.u32 %v124, %v125
    %v127 = vsub.s32 4294967266, %v122
    %v128 = vadd.s32 %v127, 127
    %v129 = vshll.u32 %v128, 23
    %v130 = vor.u32 4788187, %v129
    %v131 = vand.u32 2147483647, %v130
    %v133 = vcvt.s32.f32 %v126
    %v134 = vmul.f32 %v133, %v131
    %v135 = vxor.u32 %v134, 2147483648
    %v136 = vsel %vm53, %v135, %v134
    %v137 = vsub.s32 4, %v113
    %v138 = vsel %vm53, %v137, %v113
    %v139 = vsel %vm52, %v50, %v136
    %v140 = vsel %vm52, 0, %v138
    %v141 = vcosq.f32.pop %v139
    %v142 = vsinq.f32.pop %v139
    %vm143 = vweird.f32 %v50
    %v144 = vadd.s32 %v140, 3
    %v145 = vand.u32 %v144, 3
    %vm146 = vcmp.lt.s32.totalorder %v145, 2
    %vm147 = vcmp.eq.s32.totalorder %v145, 0
    %v148 = vxor.u32 %v142, 2147483648
    %v149 = vsel %vm147, %v141, %v148
    %vm150 = vcmp.eq.s32.totalorder %v145, 2
    %v151 = vxor.u32 %v141, 2147483648
    %v152 = vsel %vm150, %v151, %v142
    %v153 = vsel %vm146, %v149, %v152
    %v154 = vsel %vm143, nan, %v153
    %v155 = vld [vmem:[#allocation4] sm:$0xff]
    %v156 = vadd.f32 %v155, %v154
    %157 = vst [vmem:[#allocation7] sm:$0xff] %v156
    // Predicated region
    $region18: #{tpu_custom_call.1} parent=1 // pred_check
      _
    $region19: #{tpu_custom_call.1} parent=1 // pred_check_branch
      %159 = sbr.rel (0) target = $region21
    $region20: #{tpu_custom_call.1} parent=1 // pred_region
      %s161 = ssub.s32 128, 128
      %162 = vsyncadd [#allocation6], %s161
      %s164 = sshll.u32 [#allocation7], 4
      %s165 = int_to_ptr.vmem [resolvable:$true] %s164
      %167 = dma.vmem_to_hbm [thread:$0]  %s165, 128, %s4, [#allocation6]
    $region21: #{tpu_custom_call.1} parent=1 // pred_fallthru
      _
    // Predicated region
    $region22: #{tpu_custom_call.1} parent=1 // pred_check
      _
    $region23: #{tpu_custom_call.1} parent=1 // pred_check_branch
      %169 = sbr.rel (0) target = $region25
    $region24: #{tpu_custom_call.1} parent=1 // pred_region
      %170 = dma.done [#allocation6], 128
    $region25: #{tpu_custom_call.1} parent=1 // pred_fallthru
      _
    %171 = vsyncpa [#allocation5], 1
    %172 = vsyncpa [#allocation6], 1

</llo_original>
